<compile_context>
chip_gen: v5e
topology: v5e:2x2
jax: 0.10.0
libtpu: 0.0.40
codegen_flags: <defaults>
</compile_context>

<pallas_src>
import functools
import math

import jax
import jax.numpy as jnp
from jax.experimental import pallas as pl
from jax.experimental.pallas import tpu as pltpu


def _encoder_kernel(
    din_ref, tx_ref,                            # inputs: cat([cx,cy]) slab, target_x slab (bf16)
    w0f_ref, b0_ref, bk0_ref,                   # fused layer-0 weight [[w0]|[wk0;0]] + biases
    w1_ref, b1_ref, w2_ref, b2_ref,             # value path layers 1,2
    wk1_ref, bk1_ref,                           # key path layer 1
    wq0_ref, bq0_ref, wq1_ref, bq1_ref,         # query path layers 0,1 (1/sqrt(H) folded in)
    out_ref,
    *, batch_block, hidden_pad,
):
    f32 = jnp.float32
    bf16 = jnp.bfloat16
    Bb = batch_block
    Hp = hidden_pad
    Nt = out_ref.shape[1]
    Nc = din_ref.shape[0] // Bb

    relu = lambda a: jnp.maximum(a, 0.0)

    din = din_ref[...]          # (Bb*Nc, x_dim+y_dim) bf16
    tx = tx_ref[...]            # (Bb*Nt, x_dim)       bf16

    # ---- fused layer 0: one MXU pass produces value-path AND key-path
    #      layer-0 pre-activations (key block has zero rows for the y inputs).
    fused = jnp.dot(din, w0f_ref[...], preferred_element_type=f32)     # (Bb*Nc, 2*Hp)
    h = relu(fused[:, :Hp] + b0_ref[...]).astype(bf16)                 # value layer 0
    k = relu(fused[:, Hp:] + bk0_ref[...]).astype(bf16)                # key   layer 0

    # ---- value path remainder (BatchMLP num_layers=3).
    h = relu(jnp.dot(h, w1_ref[...], preferred_element_type=f32) + b1_ref[...]).astype(bf16)
    v = (jnp.dot(h, w2_ref[...], preferred_element_type=f32) + b2_ref[...]).astype(bf16)

    # ---- key path remainder (BatchMLP num_layers=2).
    k = (jnp.dot(k, wk1_ref[...], preferred_element_type=f32) + bk1_ref[...]).astype(bf16)

    # ---- query path (BatchMLP num_layers=2). 1/sqrt(H) already folded into wq1/bq1.
    q = relu(jnp.dot(tx, wq0_ref[...], preferred_element_type=f32) + bq0_ref[...]).astype(bf16)
    q = (jnp.dot(q, wq1_ref[...], preferred_element_type=f32) + bq1_ref[...]).astype(bf16)

    # Nc/Nt are multiples of 8 in this setup, so these reshapes stay on
    # (8,128) tile boundaries (no VMEM copy).
    qb = q.reshape(Bb, Nt, Hp)
    kb = k.reshape(Bb, Nc, Hp)
    vb = v.reshape(Bb, Nc, Hp)

    # ---- scaled dot-product cross attention (softmax over context points).
    logits = jax.lax.dot_general(
        qb, kb,
        dimension_numbers=(((2,), (2,)), ((0,), (0,))),
        preferred_element_type=f32,
    )                                                                  # (Bb, Nt, Nc)
    m = jnp.max(logits, axis=-1, keepdims=True)
    e = jnp.exp(logits - m)                      # f32 exp (v5e has no bf16 EUP)
    denom = jnp.sum(e, axis=-1, keepdims=True)
    p = (e * pl.reciprocal(denom, approx=True)).astype(bf16)
    out = jax.lax.dot_general(
        p, vb,
        dimension_numbers=(((2,), (1,)), ((0,), (0,))),
        preferred_element_type=f32,
    )                                                                  # (Bb, Nt, Hp)
    out_ref[...] = out.astype(out_ref.dtype)
    # TODO(synk): for production Nc/Nt, grid-tile Nt ("parallel") and Nc
    # (trailing "arbitrary") with flash-style online-softmax scratch instead of
    # materializing the full (Bb, Nt, Nc) logits buffer.


def pack_params(params, x_dim, hidden_dim):
    """One-time packing: fuse value/key layer-0 weights into one (x+y, 2*Hp) bf16
    block, fold 1/sqrt(H) into the query output layer, zero-pad the hidden dim
    to a lane-dense multiple of 128, and store all matmul weights in bf16
    (biases stay f32). Padding/fusion/folding are mathematically exact."""
    H = hidden_dim
    Hp = max(128, ((H + 127) // 128) * 128)
    inv_sqrt = 1.0 / math.sqrt(float(H))

    def pad(a, rows, cols):
        return jnp.pad(a, ((0, rows - a.shape[0]), (0, cols - a.shape[1])))

    in_dim = params["w0"].shape[0]          # x_dim + y_dim
    y_dim = in_dim - x_dim

    # fused layer-0 weight: [[w0] | [wk0 ; zeros(y_dim, Hp)]] -> (x_dim+y_dim, 2*Hp)
    w0_pad = pad(params["w0"], in_dim, Hp)
    wk0_pad = jnp.concatenate(
        [pad(params["wk0"], x_dim, Hp),
         jnp.zeros((y_dim, Hp), params["wk0"].dtype)], axis=0)
    w0f = jnp.concatenate([w0_pad, wk0_pad], axis=1)

    bf = lambda a: a.astype(jnp.bfloat16)
    f32 = lambda a: a.astype(jnp.float32)

    return {
        "w0f": bf(w0f),
        "b0":  f32(pad(params["b0"], 1, Hp)),
        "bk0": f32(pad(params["bk0"], 1, Hp)),
        "w1":  bf(pad(params["w1"], Hp, Hp)),
        "b1":  f32(pad(params["b1"], 1, Hp)),
        "w2":  bf(pad(params["w2"], Hp, Hp)),
        "b2":  f32(pad(params["b2"], 1, Hp)),
        "wk1": bf(pad(params["wk1"], Hp, Hp)),
        "bk1": f32(pad(params["bk1"], 1, Hp)),
        "wq0": bf(pad(params["wq0"], x_dim, Hp)),
        "bq0": f32(pad(params["bq0"], 1, Hp)),
        # 1/sqrt(hidden) folded into the query output layer (exact: dot is linear in q)
        "wq1": bf(pad(params["wq1"] * inv_sqrt, Hp, Hp)),
        "bq1": f32(pad(params["bq1"] * inv_sqrt, 1, Hp)),
    }


_PARAM_ORDER = ["w0f", "b0", "bk0", "w1", "b1", "w2", "b2",
                "wk1", "bk1", "wq0", "bq0", "wq1", "bq1"]


def deterministic_encoder_pallas(context_x, context_y, target_x, packed, *,
                                 hidden_dim, batch_block=None):
    """packed: output of pack_params (bf16 weights, hidden dim padded to 128)."""
    B, Nc, x_dim = context_x.shape
    _, Nt, _ = target_x.shape
    y_dim = context_y.shape[-1]
    Hp = packed["w1"].shape[0]

    # Default batch_block: give the grid several steps so the BlockSpec
    # auto-pipeline can overlap DMA with compute (a 1-step grid exposes all
    # DMA), while keeping the folded matmul M dimension large. On v7x an
    # even step count also shards across both TensorCores.
    if batch_block is None:
        if B >= 8 and B % 8 == 0:
            Bb = B // 8
        elif B >= 4 and B % 4 == 0:
            Bb = B // 4
        elif B % 2 == 0:
            Bb = B // 2
        else:
            Bb = 1
    else:
        Bb = batch_block
    assert B % Bb == 0, "batch_block must divide the batch size"
    n_steps = B // Bb

    # Wrapper-side slab prep: concat cx|cy once, cast inputs to bf16 (halves
    # kernel input DMA; MXU-native operand dtype).
    din = jnp.concatenate([context_x, context_y], axis=-1)
    din = din.reshape(B * Nc, x_dim + y_dim).astype(jnp.bfloat16)
    tx = target_x.reshape(B * Nt, x_dim).astype(jnp.bfloat16)

    param_list = [packed[n] for n in _PARAM_ORDER]

    row_spec = lambda rows, cols: pl.BlockSpec((rows, cols), lambda b: (b, 0))
    # Grid-invariant weights: constant index_map (no re-copy across steps);
    # single-buffer them so no dead second buffer is allocated per weight.
    shared = lambda a: pl.BlockSpec(a.shape, lambda b: (0,) * a.ndim,
                                    pipeline_mode=pl.Buffered(1))

    kernel = functools.partial(_encoder_kernel, batch_block=Bb, hidden_pad=Hp)

    # Raise the scoped VMEM limit above the 16 MiB (v5e) / 32 MiB (v6e/v7x)
    # defaults but stay well under v7x's 64 MiB physical VMEM.
    vmem_limit = 48 * 1024 * 1024
    try:
        cap = pltpu.get_tpu_info().vmem_capacity_bytes
        vmem_limit = min(vmem_limit, int(cap * 3 // 4))
    except Exception:
        pass

    out_padded = pl.pallas_call(
        kernel,
        out_shape=jax.ShapeDtypeStruct((B, Nt, Hp), jnp.float32),
        grid_spec=pltpu.PrefetchScalarGridSpec(
            num_scalar_prefetch=0,
            grid=(n_steps,),
            in_specs=[row_spec(Bb * Nc, x_dim + y_dim),
                      row_spec(Bb * Nt, x_dim)]
                     + [shared(p) for p in param_list],
            out_specs=pl.BlockSpec((Bb, Nt, Hp), lambda b: (b, 0, 0)),
        ),
        compiler_params=pltpu.CompilerParams(
            dimension_semantics=("parallel",),
            vmem_limit_bytes=vmem_limit,
        ),
    )(din, tx, *param_list)

    # Kernel output is lane-dense (Hp); trim the zero padding back to H here.
    return out_padded[..., :hidden_dim]


def deterministic_encoder_ref(context_x, context_y, target_x, params):
    """Pure-JAX f32 reference mirroring the PyTorch forward, for correctness check."""
    d_in = jnp.concatenate([context_x, context_y], axis=-1)
    h = jax.nn.relu(d_in @ params["w0"] + params["b0"])
    h = jax.nn.relu(h @ params["w1"] + params["b1"])
    v = h @ params["w2"] + params["b2"]
    k = jax.nn.relu(context_x @ params["wk0"] + params["bk0"]) @ params["wk1"] + params["bk1"]
    q = jax.nn.relu(target_x @ params["wq0"] + params["bq0"]) @ params["wq1"] + params["bq1"]
    scale = math.sqrt(q.shape[-1])
    logits = jnp.einsum("bjk,bik->bij", k, q) / scale
    w = jax.nn.softmax(logits, axis=-1)
    return jnp.einsum("bik,bkj->bij", w, v)


def _init_linear(key, fan_in, fan_out):
    # Deterministic stand-in for PyTorch's default nn.Linear init
    # (uniform in [-1/sqrt(fan_in), 1/sqrt(fan_in)]), stored as (in, out).
    kw, kb = jax.random.split(key)
    bound = 1.0 / math.sqrt(fan_in)
    w = jax.random.uniform(kw, (fan_in, fan_out), jnp.float32, -bound, bound)
    b = jax.random.uniform(kb, (1, fan_out), jnp.float32, -bound, bound)
    return w, b


def make_params(x_dim, y_dim, hidden_dim, seed=42):
    in_dim = x_dim + y_dim
    keys = jax.random.split(jax.random.PRNGKey(seed), 7)
    params = {}
    # value encoder: BatchMLP(input_dim -> hidden, num_layers=3)
    params["w0"], params["b0"] = _init_linear(keys[0], in_dim, hidden_dim)
    params["w1"], params["b1"] = _init_linear(keys[1], hidden_dim, hidden_dim)
    params["w2"], params["b2"] = _init_linear(keys[2], hidden_dim, hidden_dim)
    # cross-attention key/query MLPs: BatchMLP(x_dim -> hidden, num_layers=2)
    params["wk0"], params["bk0"] = _init_linear(keys[3], x_dim, hidden_dim)
    params["wk1"], params["bk1"] = _init_linear(keys[4], hidden_dim, hidden_dim)
    params["wq0"], params["bq0"] = _init_linear(keys[5], x_dim, hidden_dim)
    params["wq1"], params["bq1"] = _init_linear(keys[6], hidden_dim, hidden_dim)
    return params


if __name__ == "__main__":
    B, Nc, Nt = 2, 16, 16
    x_dim, y_dim, hidden_dim = 3, 2, 32

    key = jax.random.PRNGKey(0)
    kx, ky, kt = jax.random.split(key, 3)
    context_x = jax.random.normal(kx, (B, Nc, x_dim), jnp.float32)
    context_y = jax.random.normal(ky, (B, Nc, y_dim), jnp.float32)
    target_x = jax.random.normal(kt, (B, Nt, x_dim), jnp.float32)

    params = make_params(x_dim, y_dim, hidden_dim)
    packed = pack_params(params, x_dim, hidden_dim)   # one-time packing / padding

    out = deterministic_encoder_pallas(
        context_x, context_y, target_x, packed, hidden_dim=hidden_dim)
    out = jax.block_until_ready(out)

    ref = deterministic_encoder_ref(context_x, context_y, target_x, params)
    assert out.shape == (B, Nt, hidden_dim)
    # tolerance relaxed for bf16 matmul operands + approx (EUP) softmax reciprocal
    assert jnp.allclose(out, ref, atol=2e-2, rtol=2e-2), "mismatch vs reference"

    print("KERNEL_OK")
</pallas_src>

<mosaic_0001>
module attributes {stable_mosaic.version = 11 : i64} {
  func.func @_encoder_kernel(%arg0: i32, %arg1: memref<16x5xbf16, #tpu.memory_space<vmem>>, %arg2: memref<16x3xbf16, #tpu.memory_space<vmem>>, %arg3: memref<5x256xbf16, #tpu.memory_space<vmem>>, %arg4: memref<1x128xf32, #tpu.memory_space<vmem>>, %arg5: memref<1x128xf32, #tpu.memory_space<vmem>>, %arg6: memref<128x128xbf16, #tpu.memory_space<vmem>>, %arg7: memref<1x128xf32, #tpu.memory_space<vmem>>, %arg8: memref<128x128xbf16, #tpu.memory_space<vmem>>, %arg9: memref<1x128xf32, #tpu.memory_space<vmem>>, %arg10: memref<128x128xbf16, #tpu.memory_space<vmem>>, %arg11: memref<1x128xf32, #tpu.memory_space<vmem>>, %arg12: memref<3x128xbf16, #tpu.memory_space<vmem>>, %arg13: memref<1x128xf32, #tpu.memory_space<vmem>>, %arg14: memref<128x128xbf16, #tpu.memory_space<vmem>>, %arg15: memref<1x128xf32, #tpu.memory_space<vmem>>, %arg16: memref<1x16x128xf32, #tpu.memory_space<vmem>>) attributes {dimension_semantics = [#tpu.dimension_semantics<parallel>], iteration_bounds = array<i64: 2>, scalar_prefetch = 0 : i64, scratch_operands = 0 : i64, tpu.core_type = #tpu.core_type<tc>, window_params = [{transform_indices = @transform_0, window_bounds = array<i64: 16, 5>}, {transform_indices = @transform_1, window_bounds = array<i64: 16, 3>}, {pipeline_mode = #tpu.pipeline_mode<synchronous>, transform_indices = @transform_2, window_bounds = array<i64: 5, 256>}, {pipeline_mode = #tpu.pipeline_mode<synchronous>, transform_indices = @transform_3, window_bounds = array<i64: 1, 128>}, {pipeline_mode = #tpu.pipeline_mode<synchronous>, transform_indices = @transform_4, window_bounds = array<i64: 1, 128>}, {pipeline_mode = #tpu.pipeline_mode<synchronous>, transform_indices = @transform_5, window_bounds = array<i64: 128, 128>}, {pipeline_mode = #tpu.pipeline_mode<synchronous>, transform_indices = @transform_6, window_bounds = array<i64: 1, 128>}, {pipeline_mode = #tpu.pipeline_mode<synchronous>, transform_indices = @transform_7, window_bounds = array<i64: 128, 128>}, {pipeline_mode = #tpu.pipeline_mode<synchronous>, transform_indices = @transform_8, window_bounds = array<i64: 1, 128>}, {pipeline_mode = #tpu.pipeline_mode<synchronous>, transform_indices = @transform_9, window_bounds = array<i64: 128, 128>}, {pipeline_mode = #tpu.pipeline_mode<synchronous>, transform_indices = @transform_10, window_bounds = array<i64: 1, 128>}, {pipeline_mode = #tpu.pipeline_mode<synchronous>, transform_indices = @transform_11, window_bounds = array<i64: 3, 128>}, {pipeline_mode = #tpu.pipeline_mode<synchronous>, transform_indices = @transform_12, window_bounds = array<i64: 1, 128>}, {pipeline_mode = #tpu.pipeline_mode<synchronous>, transform_indices = @transform_13, window_bounds = array<i64: 128, 128>}, {pipeline_mode = #tpu.pipeline_mode<synchronous>, transform_indices = @transform_14, window_bounds = array<i64: 1, 128>}, {transform_indices = @transform_15, window_bounds = array<i64: 1, 16, 128>}]} {
    %c0 = arith.constant 0 : index
    %c0_0 = arith.constant 0 : index
    %0 = vector.load %arg1[%c0, %c0_0] : memref<16x5xbf16, #tpu.memory_space<vmem>>, vector<16x5xbf16>
    %c0_1 = arith.constant 0 : index
    %c0_2 = arith.constant 0 : index
    %1 = vector.load %arg2[%c0_1, %c0_2] : memref<16x3xbf16, #tpu.memory_space<vmem>>, vector<16x3xbf16>
    %c0_3 = arith.constant 0 : index
    %c0_4 = arith.constant 0 : index
    %2 = vector.load %arg3[%c0_3, %c0_4] : memref<5x256xbf16, #tpu.memory_space<vmem>>, vector<5x256xbf16>
    %cst = arith.constant dense<0.000000e+00> : vector<16x256xf32>
    %3 = tpu.matmul %0, %2, %cst {dimension_numbers = #tpu.dot_dimension_numbers<[1], [0], [0], [1], [0, 0, 1, 1], [], []>} : vector<16x5xbf16>, vector<5x256xbf16>, vector<16x256xf32> -> vector<16x256xf32>
    %4 = vector.extract_strided_slice %3 {offsets = [0, 0], sizes = [16, 128], strides = [1, 1]} : vector<16x256xf32> to vector<16x128xf32>
    %c0_5 = arith.constant 0 : index
    %c0_6 = arith.constant 0 : index
    %5 = vector.load %arg4[%c0_5, %c0_6] : memref<1x128xf32, #tpu.memory_space<vmem>>, vector<1x128xf32>
    %6 = vector.broadcast %5 : vector<1x128xf32> to vector<16x128xf32>
    %7 = arith.addf %4, %6 : vector<16x128xf32>
    %cst_7 = arith.constant 0.000000e+00 : f32
    %8 = vector.broadcast %cst_7 : f32 to vector<16x128xf32>
    %9 = arith.maximumf %7, %8 : vector<16x128xf32>
    %10 = arith.truncf %9 : vector<16x128xf32> to vector<16x128xbf16>
    %11 = vector.extract_strided_slice %3 {offsets = [0, 128], sizes = [16, 128], strides = [1, 1]} : vector<16x256xf32> to vector<16x128xf32>
    %c0_8 = arith.constant 0 : index
    %c0_9 = arith.constant 0 : index
    %12 = vector.load %arg5[%c0_8, %c0_9] : memref<1x128xf32, #tpu.memory_space<vmem>>, vector<1x128xf32>
    %13 = vector.broadcast %12 : vector<1x128xf32> to vector<16x128xf32>
    %14 = arith.addf %11, %13 : vector<16x128xf32>
    %cst_10 = arith.constant 0.000000e+00 : f32
    %15 = vector.broadcast %cst_10 : f32 to vector<16x128xf32>
    %16 = arith.maximumf %14, %15 : vector<16x128xf32>
    %17 = arith.truncf %16 : vector<16x128xf32> to vector<16x128xbf16>
    %c0_11 = arith.constant 0 : index
    %c0_12 = arith.constant 0 : index
    %18 = vector.load %arg6[%c0_11, %c0_12] : memref<128x128xbf16, #tpu.memory_space<vmem>>, vector<128x128xbf16>
    %cst_13 = arith.constant dense<0.000000e+00> : vector<16x128xf32>
    %19 = tpu.matmul %10, %18, %cst_13 {dimension_numbers = #tpu.dot_dimension_numbers<[1], [0], [0], [1], [0, 0, 1, 1], [], []>} : vector<16x128xbf16>, vector<128x128xbf16>, vector<16x128xf32> -> vector<16x128xf32>
    %c0_14 = arith.constant 0 : index
    %c0_15 = arith.constant 0 : index
    %20 = vector.load %arg7[%c0_14, %c0_15] : memref<1x128xf32, #tpu.memory_space<vmem>>, vector<1x128xf32>
    %21 = vector.broadcast %20 : vector<1x128xf32> to vector<16x128xf32>
    %22 = arith.addf %19, %21 : vector<16x128xf32>
    %cst_16 = arith.constant 0.000000e+00 : f32
    %23 = vector.broadcast %cst_16 : f32 to vector<16x128xf32>
    %24 = arith.maximumf %22, %23 : vector<16x128xf32>
    %25 = arith.truncf %24 : vector<16x128xf32> to vector<16x128xbf16>
    %c0_17 = arith.constant 0 : index
    %c0_18 = arith.constant 0 : index
    %26 = vector.load %arg8[%c0_17, %c0_18] : memref<128x128xbf16, #tpu.memory_space<vmem>>, vector<128x128xbf16>
    %cst_19 = arith.constant dense<0.000000e+00> : vector<16x128xf32>
    %27 = tpu.matmul %25, %26, %cst_19 {dimension_numbers = #tpu.dot_dimension_numbers<[1], [0], [0], [1], [0, 0, 1, 1], [], []>} : vector<16x128xbf16>, vector<128x128xbf16>, vector<16x128xf32> -> vector<16x128xf32>
    %c0_20 = arith.constant 0 : index
    %c0_21 = arith.constant 0 : index
    %28 = vector.load %arg9[%c0_20, %c0_21] : memref<1x128xf32, #tpu.memory_space<vmem>>, vector<1x128xf32>
    %29 = vector.broadcast %28 : vector<1x128xf32> to vector<16x128xf32>
    %30 = arith.addf %27, %29 : vector<16x128xf32>
    %31 = arith.truncf %30 : vector<16x128xf32> to vector<16x128xbf16>
    %c0_22 = arith.constant 0 : index
    %c0_23 = arith.constant 0 : index
    %32 = vector.load %arg10[%c0_22, %c0_23] : memref<128x128xbf16, #tpu.memory_space<vmem>>, vector<128x128xbf16>
    %cst_24 = arith.constant dense<0.000000e+00> : vector<16x128xf32>
    %33 = tpu.matmul %17, %32, %cst_24 {dimension_numbers = #tpu.dot_dimension_numbers<[1], [0], [0], [1], [0, 0, 1, 1], [], []>} : vector<16x128xbf16>, vector<128x128xbf16>, vector<16x128xf32> -> vector<16x128xf32>
    %c0_25 = arith.constant 0 : index
    %c0_26 = arith.constant 0 : index
    %34 = vector.load %arg11[%c0_25, %c0_26] : memref<1x128xf32, #tpu.memory_space<vmem>>, vector<1x128xf32>
    %35 = vector.broadcast %34 : vector<1x128xf32> to vector<16x128xf32>
    %36 = arith.addf %33, %35 : vector<16x128xf32>
    %37 = arith.truncf %36 : vector<16x128xf32> to vector<16x128xbf16>
    %c0_27 = arith.constant 0 : index
    %c0_28 = arith.constant 0 : index
    %38 = vector.load %arg12[%c0_27, %c0_28] : memref<3x128xbf16, #tpu.memory_space<vmem>>, vector<3x128xbf16>
    %cst_29 = arith.constant dense<0.000000e+00> : vector<16x128xf32>
    %39 = tpu.matmul %1, %38, %cst_29 {dimension_numbers = #tpu.dot_dimension_numbers<[1], [0], [0], [1], [0, 0, 1, 1], [], []>} : vector<16x3xbf16>, vector<3x128xbf16>, vector<16x128xf32> -> vector<16x128xf32>
    %c0_30 = arith.constant 0 : index
    %c0_31 = arith.constant 0 : index
    %40 = vector.load %arg13[%c0_30, %c0_31] : memref<1x128xf32, #tpu.memory_space<vmem>>, vector<1x128xf32>
    %41 = vector.broadcast %40 : vector<1x128xf32> to vector<16x128xf32>
    %42 = arith.addf %39, %41 : vector<16x128xf32>
    %cst_32 = arith.constant 0.000000e+00 : f32
    %43 = vector.broadcast %cst_32 : f32 to vector<16x128xf32>
    %44 = arith.maximumf %42, %43 : vector<16x128xf32>
    %45 = arith.truncf %44 : vector<16x128xf32> to vector<16x128xbf16>
    %c0_33 = arith.constant 0 : index
    %c0_34 = arith.constant 0 : index
    %46 = vector.load %arg14[%c0_33, %c0_34] : memref<128x128xbf16, #tpu.memory_space<vmem>>, vector<128x128xbf16>
    %cst_35 = arith.constant dense<0.000000e+00> : vector<16x128xf32>
    %47 = tpu.matmul %45, %46, %cst_35 {dimension_numbers = #tpu.dot_dimension_numbers<[1], [0], [0], [1], [0, 0, 1, 1], [], []>} : vector<16x128xbf16>, vector<128x128xbf16>, vector<16x128xf32> -> vector<16x128xf32>
    %c0_36 = arith.constant 0 : index
    %c0_37 = arith.constant 0 : index
    %48 = vector.load %arg15[%c0_36, %c0_37] : memref<1x128xf32, #tpu.memory_space<vmem>>, vector<1x128xf32>
    %49 = vector.broadcast %48 : vector<1x128xf32> to vector<16x128xf32>
    %50 = arith.addf %47, %49 : vector<16x128xf32>
    %51 = arith.truncf %50 : vector<16x128xf32> to vector<16x128xbf16>
    %52 = vector.shape_cast %51 : vector<16x128xbf16> to vector<1x16x128xbf16>
    %53 = vector.shape_cast %37 : vector<16x128xbf16> to vector<1x16x128xbf16>
    %54 = vector.shape_cast %31 : vector<16x128xbf16> to vector<1x16x128xbf16>
    %cst_38 = arith.constant dense<0.000000e+00> : vector<1x16x16xf32>
    %55 = tpu.matmul %52, %53, %cst_38 {dimension_numbers = #tpu.dot_dimension_numbers<[2], [2], [1], [1], [0, 0, 0, 1, 1, 1], [0], [0]>} : vector<1x16x128xbf16>, vector<1x16x128xbf16>, vector<1x16x16xf32> -> vector<1x16x16xf32>
    %cst_39 = arith.constant dense<0xFF800000> : vector<1x16xf32>
    %56 = vector.multi_reduction <maximumf>, %55, %cst_39 [2] : vector<1x16x16xf32> to vector<1x16xf32>
    %57 = vector.shape_cast %56 : vector<1x16xf32> to vector<1x16x1xf32>
    %58 = vector.broadcast %57 : vector<1x16x1xf32> to vector<1x16x16xf32>
    %59 = arith.subf %55, %58 : vector<1x16x16xf32>
    %60 = math.exp %59 : vector<1x16x16xf32>
    %cst_40 = arith.constant dense<0.000000e+00> : vector<1x16xf32>
    %61 = vector.multi_reduction <add>, %60, %cst_40 [2] : vector<1x16x16xf32> to vector<1x16xf32>
    %62 = vector.shape_cast %61 : vector<1x16xf32> to vector<1x16x1xf32>
    %63 = tpu.reciprocal %62 {approx = true} : vector<1x16x1xf32> -> vector<1x16x1xf32>
    %64 = vector.broadcast %63 : vector<1x16x1xf32> to vector<1x16x16xf32>
    %65 = arith.mulf %60, %64 : vector<1x16x16xf32>
    %66 = arith.truncf %65 : vector<1x16x16xf32> to vector<1x16x16xbf16>
    %cst_41 = arith.constant dense<0.000000e+00> : vector<1x16x128xf32>
    %67 = tpu.matmul %66, %54, %cst_41 {dimension_numbers = #tpu.dot_dimension_numbers<[2], [1], [1], [2], [0, 0, 0, 1, 1, 2], [0], [0]>} : vector<1x16x16xbf16>, vector<1x16x128xbf16>, vector<1x16x128xf32> -> vector<1x16x128xf32>
    %c0_42 = arith.constant 0 : index
    %c0_43 = arith.constant 0 : index
    %c0_44 = arith.constant 0 : index
    %68 = vector.load %arg16[%c0_42, %c0_43, %c0_44] : memref<1x16x128xf32, #tpu.memory_space<vmem>>, vector<1x16x128xf32>
    tpu.vector_store %arg16[%c0_42, %c0_43, %c0_44], %67 {strides = array<i32>} : memref<1x16x128xf32, #tpu.memory_space<vmem>>, vector<1x16x128xf32>,
    return
  }
  func.func @transform_0(%arg0: i32) -> (i32, i32) {
    %c0_i32 = arith.constant 0 : i32
    %c0_i32_0 = arith.constant 0 : i32
    return %arg0, %c0_i32 : i32, i32
  }
  func.func @transform_1(%arg0: i32) -> (i32, i32) {
    %c0_i32 = arith.constant 0 : i32
    %c0_i32_0 = arith.constant 0 : i32
    return %arg0, %c0_i32 : i32, i32
  }
  func.func @transform_2(%arg0: i32) -> (i32, i32) {
    %c0_i32 = arith.constant 0 : i32
    %c0_i32_0 = arith.constant 0 : i32
    %c0_i32_1 = arith.constant 0 : i32
    return %c0_i32, %c0_i32_0 : i32, i32
  }
  func.func @transform_3(%arg0: i32) -> (i32, i32) {
    %c0_i32 = arith.constant 0 : i32
    %c0_i32_0 = arith.constant 0 : i32
    %c0_i32_1 = arith.constant 0 : i32
    return %c0_i32, %c0_i32_0 : i32, i32
  }
  func.func @transform_4(%arg0: i32) -> (i32, i32) {
    %c0_i32 = arith.constant 0 : i32
    %c0_i32_0 = arith.constant 0 : i32
    %c0_i32_1 = arith.constant 0 : i32
    return %c0_i32, %c0_i32_0 : i32, i32
  }
  func.func @transform_5(%arg0: i32) -> (i32, i32) {
    %c0_i32 = arith.constant 0 : i32
    %c0_i32_0 = arith.constant 0 : i32
    %c0_i32_1 = arith.constant 0 : i32
    return %c0_i32, %c0_i32_0 : i32, i32
  }
  func.func @transform_6(%arg0: i32) -> (i32, i32) {
    %c0_i32 = arith.constant 0 : i32
    %c0_i32_0 = arith.constant 0 : i32
    %c0_i32_1 = arith.constant 0 : i32
    return %c0_i32, %c0_i32_0 : i32, i32
  }
  func.func @transform_7(%arg0: i32) -> (i32, i32) {
    %c0_i32 = arith.constant 0 : i32
    %c0_i32_0 = arith.constant 0 : i32
    %c0_i32_1 = arith.constant 0 : i32
    return %c0_i32, %c0_i32_0 : i32, i32
  }
  func.func @transform_8(%arg0: i32) -> (i32, i32) {
    %c0_i32 = arith.constant 0 : i32
    %c0_i32_0 = arith.constant 0 : i32
    %c0_i32_1 = arith.constant 0 : i32
    return %c0_i32, %c0_i32_0 : i32, i32
  }
  func.func @transform_9(%arg0: i32) -> (i32, i32) {
    %c0_i32 = arith.constant 0 : i32
    %c0_i32_0 = arith.constant 0 : i32
    %c0_i32_1 = arith.constant 0 : i32
    return %c0_i32, %c0_i32_0 : i32, i32
  }
  func.func @transform_10(%arg0: i32) -> (i32, i32) {
    %c0_i32 = arith.constant 0 : i32
    %c0_i32_0 = arith.constant 0 : i32
    %c0_i32_1 = arith.constant 0 : i32
    return %c0_i32, %c0_i32_0 : i32, i32
  }
  func.func @transform_11(%arg0: i32) -> (i32, i32) {
    %c0_i32 = arith.constant 0 : i32
    %c0_i32_0 = arith.constant 0 : i32
    %c0_i32_1 = arith.constant 0 : i32
    return %c0_i32, %c0_i32_0 : i32, i32
  }
  func.func @transform_12(%arg0: i32) -> (i32, i32) {
    %c0_i32 = arith.constant 0 : i32
    %c0_i32_0 = arith.constant 0 : i32
    %c0_i32_1 = arith.constant 0 : i32
    return %c0_i32, %c0_i32_0 : i32, i32
  }
  func.func @transform_13(%arg0: i32) -> (i32, i32) {
    %c0_i32 = arith.constant 0 : i32
    %c0_i32_0 = arith.constant 0 : i32
    %c0_i32_1 = arith.constant 0 : i32
    return %c0_i32, %c0_i32_0 : i32, i32
  }
  func.func @transform_14(%arg0: i32) -> (i32, i32) {
    %c0_i32 = arith.constant 0 : i32
    %c0_i32_0 = arith.constant 0 : i32
    %c0_i32_1 = arith.constant 0 : i32
    return %c0_i32, %c0_i32_0 : i32, i32
  }
  func.func @transform_15(%arg0: i32) -> (i32, i32, i32) {
    %c0_i32 = arith.constant 0 : i32
    %c0_i32_0 = arith.constant 0 : i32
    %c0_i32_1 = arith.constant 0 : i32
    return %arg0, %c0_i32, %c0_i32_0 : i32, i32, i32
  }
}

</mosaic_0001>

<llo_original>
// kernel: tpu_custom_call.1
$region0: #{tpu_custom_call.1}
  #allocation0 [shape = 'u32[]', space=smem, size = 0x4, offset = 0x4, fixed_abs, tag = 'smem constant byte address 0x4 - core index']
  #allocation1 [shape = 'u32[72,128]{1,0:T(1,128)}', space=vmem, size = 0x9000, scoped, tag = 'internal scratch']
  %s0 = inlined_call_operand.vmem [shape: bf16[32,5], index: 0, kind: input, shape index: {}]
  %s1 = inlined_call_operand.vmem [shape: bf16[32,3], index: 1, kind: input, shape index: {}]
  %s2 = inlined_call_operand.vmem [shape: bf16[5,256], index: 2, kind: input, shape index: {}]
  %s3 = inlined_call_operand.vmem [shape: f32[1,128], index: 3, kind: input, shape index: {}]
  %s4 = inlined_call_operand.vmem [shape: f32[1,128], index: 4, kind: input, shape index: {}]
  %s5 = inlined_call_operand.hbm [shape: bf16[128,128], index: 5, kind: input, shape index: {}]
  %s6 = inlined_call_operand.vmem [shape: f32[1,128], index: 6, kind: input, shape index: {}]
  %s7 = inlined_call_operand.hbm [shape: bf16[128,128], index: 7, kind: input, shape index: {}]
  %s8 = inlined_call_operand.vmem [shape: f32[1,128], index: 8, kind: input, shape index: {}]
  %s9 = inlined_call_operand.hbm [shape: bf16[128,128], index: 9, kind: input, shape index: {}]
  %s10 = inlined_call_operand.vmem [shape: f32[1,128], index: 10, kind: input, shape index: {}]
  %s11 = inlined_call_operand.vmem [shape: bf16[3,128], index: 11, kind: input, shape index: {}]
  %s12 = inlined_call_operand.vmem [shape: f32[1,128], index: 12, kind: input, shape index: {}]
  %s13 = inlined_call_operand.hbm [shape: bf16[128,128], index: 13, kind: input, shape index: {}]
  %s14 = inlined_call_operand.vmem [shape: f32[1,128], index: 14, kind: input, shape index: {}]
  %s15 = inlined_call_operand.hbm [shape: f32[2,16,128], index: 15, kind: output, shape index: {}]
  %s16 = sld [smem:[#allocation0]]
  $region109: #{tpu_custom_call.1} parent=0
    _
  %s18 = ssub.s32 1, %s16
  %s19 = scalar_select 0, %s18, %s16
  $region1: #{tpu_custom_call.1} parent=0
    #allocation2 [shape = 'u8[32768]{0}', space=vmem, size = 0x8000, scoped, tag = 'input window, operand 5, single buffered']
    #allocation3 [shape = 's32[2]{0}', space=sflag, size = 0x8, scoped, tag = 'scoped memory for tpu_custom_call.1']
    #allocation4 [shape = 's32[2]{0}', space=sflag, size = 0x8, scoped, tag = 'scoped memory for tpu_custom_call.1']
    #allocation5 [shape = 'u8[32768]{0}', space=vmem, size = 0x8000, scoped, tag = 'input window, operand 7, single buffered']
    #allocation6 [shape = 's32[1]{0}', space=sflag, size = 0x4, scoped, tag = 'scoped memory for tpu_custom_call.1']
    #allocation7 [shape = 'u8[32768]{0}', space=vmem, size = 0x8000, scoped, tag = 'input window, operand 9, single buffered']
    #allocation8 [shape = 'u8[32768]{0}', space=vmem, size = 0x8000, scoped, tag = 'input window, operand 13, single buffered']
    #allocation9 [shape = 's32[1]{0}', space=sflag, size = 0x4, scoped, tag = 'scoped memory for tpu_custom_call.1']
    #allocation10 [shape = 'u8[16384]{0}', space=vmem, size = 0x4000, scoped, tag = 'output window, operand 0']
    %20 = vsyncpa [#allocation3], 0
    %21 = vsyncpa [#allocation6], 0
    %22 = vsyncpa [#allocation9], 0
    %23 = vsyncpa [#allocation4], 0
    %s24 = scalar_lea.sflag [#allocation4], 1
    %25 = vsyncpa %s24, 0
    loop: start=0, step=1, limit=4
    $region2: #{tpu_custom_call.1} parent=1 // loop_pre_header
      _
    $region3: #{tpu_custom_call.1} parent=1 // loop_header
      %s27 = sphi 0, %s31
      %p28 = scmp.ge.s32.totalorder %s27, 4
      %s37 = sphi 0, %s39
      %s40 = sphi 0, %s37
      %s41 = sphi 0, %s40
      %s57 = sphi 0, %s41
      %s63 = sphi 0, %s65
      %s66 = sphi 0, %s63
      %s67 = sphi 0, %s66
      %s83 = sphi 0, %s67
      %s87 = sphi 0, %s87
      %s89 = sphi 0, %s87
      %s90 = sphi 0, %s89
      %s104 = sphi 0, %s90
      %s108 = sphi 0, %s108
      %s110 = sphi 0, %s108
      %s111 = sphi 0, %s110
      %s125 = sphi 0, %s111
      %s129 = sphi 0, %s129
      %s131 = sphi 0, %s129
      %s132 = sphi 0, %s131
      %s146 = sphi 0, %s132
      %s150 = sphi 0, %s150
      %s152 = sphi 0, %s150
      %s153 = sphi 0, %s152
      %s167 = sphi 0, %s153
      %s171 = sphi 0, %s171
      %s173 = sphi 0, %s171
      %s174 = sphi 0, %s173
      %s188 = sphi 0, %s174
      %s192 = sphi 0, %s192
      %s194 = sphi 0, %s192
      %s195 = sphi 0, %s194
      %s209 = sphi 0, %s195
      %s213 = sphi 0, %s213
      %s215 = sphi 0, %s213
      %s216 = sphi 0, %s215
      %s230 = sphi 0, %s216
      %s234 = sphi 0, %s234
      %s236 = sphi 0, %s234
      %s237 = sphi 0, %s236
      %s251 = sphi 0, %s237
      %s255 = sphi 0, %s255
      %s257 = sphi 0, %s255
      %s258 = sphi 0, %s257
      %s272 = sphi 0, %s258
      %s276 = sphi 0, %s276
      %s278 = sphi 0, %s276
      %s279 = sphi 0, %s278
      %s293 = sphi 0, %s279
      %s297 = sphi 0, %s297
      %s299 = sphi 0, %s297
      %s300 = sphi 0, %s299
      %s314 = sphi 0, %s300
      %s318 = sphi 0, %s318
      %s320 = sphi 0, %s318
      %s321 = sphi 0, %s320
      %s335 = sphi 0, %s321
      %s339 = sphi 0, %s339
      %s341 = sphi 0, %s339
      %s342 = sphi 0, %s341
      %s356 = sphi 0, %s342
      %s362 = sphi 0, %s364
      %s365 = sphi 0, %s362
      %s366 = sphi 0, %s365
      %s382 = sphi 0, %s366
    $region4: #{tpu_custom_call.1} parent=1 // loop_header_branch
      %30 = sbr.rel (%p28) target = $region8
    $region5: #{tpu_custom_call.1} parent=1 // loop_body
      %s32 = ssub.s32 %s27, 1
      %s33 = ssub.s32 %s27, 2
      %s34 = sadd.s32 %s27, 1
      %s35 = ssub.s32 %s27, %s34
      %p36 = scmp.eq.s32.totalorder %s35, 0
      %s38 = sadd.s32 %s37, 1
      %s39 = scalar_select %p36, %s37, %s38
      %p42 = pneg %p36
      %p43 = scmp.eq.s32.totalorder %s27, 1
      %p44 = por %p42, %p43
      %p45 = scmp.ne.s32.totalorder %s37, %s40
      %p46 = scmp.eq.s32.totalorder %s27, 0
      %p47 = por %p45, %p46
      %p48 = scmp.ne.s32.totalorder %s37, %s40
      %p49 = scmp.eq.s32.totalorder %s32, 1
      %p50 = por %p48, %p49
      %p51 = scmp.ne.s32.totalorder %s40, %s41
      %p52 = scmp.eq.s32.totalorder %s32, 0
      %p53 = por %p51, %p52
      %p54 = scmp.ne.s32.totalorder %s40, %s41
      %p55 = scmp.eq.s32.totalorder %s33, 1
      %p56 = por %p54, %p55
      %p58 = scmp.ne.s32.totalorder %s41, %s57
      %p59 = scmp.eq.s32.totalorder %s33, 0
      %p60 = por %p58, %p59
      %s61 = ssub.s32 %s27, %s34
      %p62 = scmp.eq.s32.totalorder %s61, 0
      %s64 = sadd.s32 %s63, 1
      %s65 = scalar_select %p62, %s63, %s64
      %p68 = pneg %p62
      %p69 = scmp.eq.s32.totalorder %s27, 1
      %p70 = por %p68, %p69
      %p71 = scmp.ne.s32.totalorder %s63, %s66
      %p72 = scmp.eq.s32.totalorder %s27, 0
      %p73 = por %p71, %p72
      %p74 = scmp.ne.s32.totalorder %s63, %s66
      %p75 = scmp.eq.s32.totalorder %s32, 1
      %p76 = por %p74, %p75
      %p77 = scmp.ne.s32.totalorder %s66, %s67
      %p78 = scmp.eq.s32.totalorder %s32, 0
      %p79 = por %p77, %p78
      %p80 = scmp.ne.s32.totalorder %s66, %s67
      %p81 = scmp.eq.s32.totalorder %s33, 1
      %p82 = por %p80, %p81
      %p84 = scmp.ne.s32.totalorder %s67, %s83
      %p85 = scmp.eq.s32.totalorder %s33, 0
      %p86 = por %p84, %p85
      %s88 = sadd.s32 %s87, 1
      %p91 = scmp.eq.s32.totalorder %s27, 1
      %p92 = scmp.ne.s32.totalorder %s87, %s89
      %p93 = scmp.eq.s32.totalorder %s27, 0
      %p94 = por %p92, %p93
      %p95 = scmp.ne.s32.totalorder %s87, %s89
      %p96 = scmp.eq.s32.totalorder %s32, 1
      %p97 = por %p95, %p96
      %p98 = scmp.ne.s32.totalorder %s89, %s90
      %p99 = scmp.eq.s32.totalorder %s32, 0
      %p100 = por %p98, %p99
      %p101 = scmp.ne.s32.totalorder %s89, %s90
      %p102 = scmp.eq.s32.totalorder %s33, 1
      %p103 = por %p101, %p102
      %p105 = scmp.ne.s32.totalorder %s90, %s104
      %p106 = scmp.eq.s32.totalorder %s33, 0
      %p107 = por %p105, %p106
      %s109 = sadd.s32 %s108, 1
      %p112 = scmp.eq.s32.totalorder %s27, 1
      %p113 = scmp.ne.s32.totalorder %s108, %s110
      %p114 = scmp.eq.s32.totalorder %s27, 0
      %p115 = por %p113, %p114
      %p116 = scmp.ne.s32.totalorder %s108, %s110
      %p117 = scmp.eq.s32.totalorder %s32, 1
      %p118 = por %p116, %p117
      %p119 = scmp.ne.s32.totalorder %s110, %s111
      %p120 = scmp.eq.s32.totalorder %s32, 0
      %p121 = por %p119, %p120
      %p122 = scmp.ne.s32.totalorder %s110, %s111
      %p123 = scmp.eq.s32.totalorder %s33, 1
      %p124 = por %p122, %p123
      %p126 = scmp.ne.s32.totalorder %s111, %s125
      %p127 = scmp.eq.s32.totalorder %s33, 0
      %p128 = por %p126, %p127
      %s130 = sadd.s32 %s129, 1
      %p133 = scmp.eq.s32.totalorder %s27, 1
      %p134 = scmp.ne.s32.totalorder %s129, %s131
      %p135 = scmp.eq.s32.totalorder %s27, 0
      %p136 = por %p134, %p135
      %p137 = scmp.ne.s32.totalorder %s129, %s131
      %p138 = scmp.eq.s32.totalorder %s32, 1
      %p139 = por %p137, %p138
      %p140 = scmp.ne.s32.totalorder %s131, %s132
      %p141 = scmp.eq.s32.totalorder %s32, 0
      %p142 = por %p140, %p141
      %p143 = scmp.ne.s32.totalorder %s131, %s132
      %p144 = scmp.eq.s32.totalorder %s33, 1
      %p145 = por %p143, %p144
      %p147 = scmp.ne.s32.totalorder %s132, %s146
      %p148 = scmp.eq.s32.totalorder %s33, 0
      %p149 = por %p147, %p148
      %s151 = sadd.s32 %s150, 1
      %p154 = scmp.eq.s32.totalorder %s27, 1
      %p155 = scmp.ne.s32.totalorder %s150, %s152
      %p156 = scmp.eq.s32.totalorder %s27, 0
      %p157 = por %p155, %p156
      %p158 = scmp.ne.s32.totalorder %s150, %s152
      %p159 = scmp.eq.s32.totalorder %s32, 1
      %p160 = por %p158, %p159
      %p161 = scmp.ne.s32.totalorder %s152, %s153
      %p162 = scmp.eq.s32.totalorder %s32, 0
      %p163 = por %p161, %p162
      %p164 = scmp.ne.s32.totalorder %s152, %s153
      %p165 = scmp.eq.s32.totalorder %s33, 1
      %p166 = por %p164, %p165
      %p168 = scmp.ne.s32.totalorder %s153, %s167
      %p169 = scmp.eq.s32.totalorder %s33, 0
      %p170 = por %p168, %p169
      %s172 = sadd.s32 %s171, 1
      %p175 = scmp.eq.s32.totalorder %s27, 1
      %p176 = scmp.ne.s32.totalorder %s171, %s173
      %p177 = scmp.eq.s32.totalorder %s27, 0
      %p178 = por %p176, %p177
      %p179 = scmp.ne.s32.totalorder %s171, %s173
      %p180 = scmp.eq.s32.totalorder %s32, 1
      %p181 = por %p179, %p180
      %p182 = scmp.ne.s32.totalorder %s173, %s174
      %p183 = scmp.eq.s32.totalorder %s32, 0
      %p184 = por %p182, %p183
      %p185 = scmp.ne.s32.totalorder %s173, %s174
      %p186 = scmp.eq.s32.totalorder %s33, 1
      %p187 = por %p185, %p186
      %p189 = scmp.ne.s32.totalorder %s174, %s188
      %p190 = scmp.eq.s32.totalorder %s33, 0
      %p191 = por %p189, %p190
      %s193 = sadd.s32 %s192, 1
      %p196 = scmp.eq.s32.totalorder %s27, 1
      %p197 = scmp.ne.s32.totalorder %s192, %s194
      %p198 = scmp.eq.s32.totalorder %s27, 0
      %p199 = por %p197, %p198
      %p200 = scmp.ne.s32.totalorder %s192, %s194
      %p201 = scmp.eq.s32.totalorder %s32, 1
      %p202 = por %p200, %p201
      %p203 = scmp.ne.s32.totalorder %s194, %s195
      %p204 = scmp.eq.s32.totalorder %s32, 0
      %p205 = por %p203, %p204
      %p206 = scmp.ne.s32.totalorder %s194, %s195
      %p207 = scmp.eq.s32.totalorder %s33, 1
      %p208 = por %p206, %p207
      %p210 = scmp.ne.s32.totalorder %s195, %s209
      %p211 = scmp.eq.s32.totalorder %s33, 0
      %p212 = por %p210, %p211
      %s214 = sadd.s32 %s213, 1
      %p217 = scmp.eq.s32.totalorder %s27, 1
      %p218 = scmp.ne.s32.totalorder %s213, %s215
      %p219 = scmp.eq.s32.totalorder %s27, 0
      %p220 = por %p218, %p219
      %p221 = scmp.ne.s32.totalorder %s213, %s215
      %p222 = scmp.eq.s32.totalorder %s32, 1
      %p223 = por %p221, %p222
      %p224 = scmp.ne.s32.totalorder %s215, %s216
      %p225 = scmp.eq.s32.totalorder %s32, 0
      %p226 = por %p224, %p225
      %p227 = scmp.ne.s32.totalorder %s215, %s216
      %p228 = scmp.eq.s32.totalorder %s33, 1
      %p229 = por %p227, %p228
      %p231 = scmp.ne.s32.totalorder %s216, %s230
      %p232 = scmp.eq.s32.totalorder %s33, 0
      %p233 = por %p231, %p232
      %s235 = sadd.s32 %s234, 1
      %p238 = scmp.eq.s32.totalorder %s27, 1
      %p239 = scmp.ne.s32.totalorder %s234, %s236
      %p240 = scmp.eq.s32.totalorder %s27, 0
      %p241 = por %p239, %p240
      %p242 = scmp.ne.s32.totalorder %s234, %s236
      %p243 = scmp.eq.s32.totalorder %s32, 1
      %p244 = por %p242, %p243
      %p245 = scmp.ne.s32.totalorder %s236, %s237
      %p246 = scmp.eq.s32.totalorder %s32, 0
      %p247 = por %p245, %p246
      %p248 = scmp.ne.s32.totalorder %s236, %s237
      %p249 = scmp.eq.s32.totalorder %s33, 1
      %p250 = por %p248, %p249
      %p252 = scmp.ne.s32.totalorder %s237, %s251
      %p253 = scmp.eq.s32.totalorder %s33, 0
      %p254 = por %p252, %p253
      %s256 = sadd.s32 %s255, 1
      %p259 = scmp.eq.s32.totalorder %s27, 1
      %p260 = scmp.ne.s32.totalorder %s255, %s257
      %p261 = scmp.eq.s32.totalorder %s27, 0
      %p262 = por %p260, %p261
      %p263 = scmp.ne.s32.totalorder %s255, %s257
      %p264 = scmp.eq.s32.totalorder %s32, 1
      %p265 = por %p263, %p264
      %p266 = scmp.ne.s32.totalorder %s257, %s258
      %p267 = scmp.eq.s32.totalorder %s32, 0
      %p268 = por %p266, %p267
      %p269 = scmp.ne.s32.totalorder %s257, %s258
      %p270 = scmp.eq.s32.totalorder %s33, 1
      %p271 = por %p269, %p270
      %p273 = scmp.ne.s32.totalorder %s258, %s272
      %p274 = scmp.eq.s32.totalorder %s33, 0
      %p275 = por %p273, %p274
      %s277 = sadd.s32 %s276, 1
      %p280 = scmp.eq.s32.totalorder %s27, 1
      %p281 = scmp.ne.s32.totalorder %s276, %s278
      %p282 = scmp.eq.s32.totalorder %s27, 0
      %p283 = por %p281, %p282
      %p284 = scmp.ne.s32.totalorder %s276, %s278
      %p285 = scmp.eq.s32.totalorder %s32, 1
      %p286 = por %p284, %p285
      %p287 = scmp.ne.s32.totalorder %s278, %s279
      %p288 = scmp.eq.s32.totalorder %s32, 0
      %p289 = por %p287, %p288
      %p290 = scmp.ne.s32.totalorder %s278, %s279
      %p291 = scmp.eq.s32.totalorder %s33, 1
      %p292 = por %p290, %p291
      %p294 = scmp.ne.s32.totalorder %s279, %s293
      %p295 = scmp.eq.s32.totalorder %s33, 0
      %p296 = por %p294, %p295
      %s298 = sadd.s32 %s297, 1
      %p301 = scmp.eq.s32.totalorder %s27, 1
      %p302 = scmp.ne.s32.totalorder %s297, %s299
      %p303 = scmp.eq.s32.totalorder %s27, 0
      %p304 = por %p302, %p303
      %p305 = scmp.ne.s32.totalorder %s297, %s299
      %p306 = scmp.eq.s32.totalorder %s32, 1
      %p307 = por %p305, %p306
      %p308 = scmp.ne.s32.totalorder %s299, %s300
      %p309 = scmp.eq.s32.totalorder %s32, 0
      %p310 = por %p308, %p309
      %p311 = scmp.ne.s32.totalorder %s299, %s300
      %p312 = scmp.eq.s32.totalorder %s33, 1
      %p313 = por %p311, %p312
      %p315 = scmp.ne.s32.totalorder %s300, %s314
      %p316 = scmp.eq.s32.totalorder %s33, 0
      %p317 = por %p315, %p316
      %s319 = sadd.s32 %s318, 1
      %p322 = scmp.eq.s32.totalorder %s27, 1
      %p323 = scmp.ne.s32.totalorder %s318, %s320
      %p324 = scmp.eq.s32.totalorder %s27, 0
      %p325 = por %p323, %p324
      %p326 = scmp.ne.s32.totalorder %s318, %s320
      %p327 = scmp.eq.s32.totalorder %s32, 1
      %p328 = por %p326, %p327
      %p329 = scmp.ne.s32.totalorder %s320, %s321
      %p330 = scmp.eq.s32.totalorder %s32, 0
      %p331 = por %p329, %p330
      %p332 = scmp.ne.s32.totalorder %s320, %s321
      %p333 = scmp.eq.s32.totalorder %s33, 1
      %p334 = por %p332, %p333
      %p336 = scmp.ne.s32.totalorder %s321, %s335
      %p337 = scmp.eq.s32.totalorder %s33, 0
      %p338 = por %p336, %p337
      %s340 = sadd.s32 %s339, 1
      %p343 = scmp.eq.s32.totalorder %s27, 1
      %p344 = scmp.ne.s32.totalorder %s339, %s341
      %p345 = scmp.eq.s32.totalorder %s27, 0
      %p346 = por %p344, %p345
      %p347 = scmp.ne.s32.totalorder %s339, %s341
      %p348 = scmp.eq.s32.totalorder %s32, 1
      %p349 = por %p347, %p348
      %p350 = scmp.ne.s32.totalorder %s341, %s342
      %p351 = scmp.eq.s32.totalorder %s32, 0
      %p352 = por %p350, %p351
      %p353 = scmp.ne.s32.totalorder %s341, %s342
      %p354 = scmp.eq.s32.totalorder %s33, 1
      %p355 = por %p353, %p354
      %p357 = scmp.ne.s32.totalorder %s342, %s356
      %p358 = scmp.eq.s32.totalorder %s33, 0
      %p359 = por %p357, %p358
      %s360 = ssub.s32 %s27, %s34
      %p361 = scmp.eq.s32.totalorder %s360, 0
      %s363 = sadd.s32 %s362, 1
      %s364 = scalar_select %p361, %s362, %s363
      %p367 = pneg %p361
      %p368 = scmp.eq.s32.totalorder %s27, 1
      %p369 = por %p367, %p368
      %p370 = scmp.ne.s32.totalorder %s362, %s365
      %p371 = scmp.eq.s32.totalorder %s27, 0
      %p372 = por %p370, %p371
      %p373 = scmp.ne.s32.totalorder %s362, %s365
      %p374 = scmp.eq.s32.totalorder %s32, 1
      %p375 = por %p373, %p374
      %p376 = scmp.ne.s32.totalorder %s365, %s366
      %p377 = scmp.eq.s32.totalorder %s32, 0
      %p378 = por %p376, %p377
      %p379 = scmp.ne.s32.totalorder %s365, %s366
      %p380 = scmp.eq.s32.totalorder %s33, 1
      %p381 = por %p379, %p380
      %p383 = scmp.ne.s32.totalorder %s366, %s382
      %p384 = scmp.eq.s32.totalorder %s33, 0
      %p385 = por %p383, %p384
      %p386 = scmp.le.s32.totalorder 1, %s27
      %p387 = scmp.lt.s32.totalorder %s27, 3
      %p388 = pnand %p386, %p387
      %p389 = pneg %p388
      // Predicated region
      $region9: #{tpu_custom_call.1} parent=5 // pred_check
        _
      $region10: #{tpu_custom_call.1} parent=5 // pred_check_branch
        %391 = sbr.rel (%p388) target = $region12
      $region11: #{tpu_custom_call.1} parent=5 // pred_region
        %s392 = ssub.s32 %s27, 1
        // Predicated region
        $region13: #{tpu_custom_call.1} parent=11 // pred_check
          %p393 = pneg %p100
        $region14: #{tpu_custom_call.1} parent=11 // pred_check_branch
          %395 = sbr.rel (%p393) target = $region16
        $region15: #{tpu_custom_call.1} parent=11 // pred_region
          _
        $region16: #{tpu_custom_call.1} parent=11 // pred_fallthru
          _
        // Predicated region
        $region17: #{tpu_custom_call.1} parent=11 // pred_check
          %p396 = pneg %p121
        $region18: #{tpu_custom_call.1} parent=11 // pred_check_branch
          %398 = sbr.rel (%p396) target = $region20
        $region19: #{tpu_custom_call.1} parent=11 // pred_region
          _
        $region20: #{tpu_custom_call.1} parent=11 // pred_fallthru
          _
        // Predicated region
        $region21: #{tpu_custom_call.1} parent=11 // pred_check
          %p399 = pneg %p142
        $region22: #{tpu_custom_call.1} parent=11 // pred_check_branch
          %401 = sbr.rel (%p399) target = $region24
        $region23: #{tpu_custom_call.1} parent=11 // pred_region
          _
        $region24: #{tpu_custom_call.1} parent=11 // pred_fallthru
          _
        // Predicated region
        $region25: #{tpu_custom_call.1} parent=11 // pred_check
          %p402 = pneg %p163
        $region26: #{tpu_custom_call.1} parent=11 // pred_check_branch
          %404 = sbr.rel (%p402) target = $region28
        $region27: #{tpu_custom_call.1} parent=11 // pred_region
          %406 = vsyncadd [#allocation3], 0
          %s407 = sshll.u32 %s5, 4
          %s408 = int_to_ptr.hbm [resolvable:$true] %s407
          %s409 = sshll.u32 [#allocation2], 4
          %s410 = int_to_ptr.vmem [resolvable:$true] %s409
          %415 = dma.hbm_to_vmem [thread:$0]  %s408, 1024, %s410, [#allocation3], 64, 64, 4
        $region28: #{tpu_custom_call.1} parent=11 // pred_fallthru
          _
        // Predicated region
        $region29: #{tpu_custom_call.1} parent=11 // pred_check
          %p416 = pneg %p184
        $region30: #{tpu_custom_call.1} parent=11 // pred_check_branch
          %418 = sbr.rel (%p416) target = $region32
        $region31: #{tpu_custom_call.1} parent=11 // pred_region
          _
        $region32: #{tpu_custom_call.1} parent=11 // pred_fallthru
          _
        // Predicated region
        $region33: #{tpu_custom_call.1} parent=11 // pred_check
          %p419 = pneg %p205
        $region34: #{tpu_custom_call.1} parent=11 // pred_check_branch
          %421 = sbr.rel (%p419) target = $region36
        $region35: #{tpu_custom_call.1} parent=11 // pred_region
          %423 = vsyncadd [#allocation6], 0
          %s424 = sshll.u32 %s7, 4
          %s425 = int_to_ptr.hbm [resolvable:$true] %s424
          %s426 = sshll.u32 [#allocation5], 4
          %s427 = int_to_ptr.vmem [resolvable:$true] %s426
          %432 = dma.hbm_to_vmem [thread:$0]  %s425, 1024, %s427, [#allocation6], 64, 64, 4
        $region36: #{tpu_custom_call.1} parent=11 // pred_fallthru
          _
        // Predicated region
        $region37: #{tpu_custom_call.1} parent=11 // pred_check
          %p433 = pneg %p226
        $region38: #{tpu_custom_call.1} parent=11 // pred_check_branch
          %435 = sbr.rel (%p433) target = $region40
        $region39: #{tpu_custom_call.1} parent=11 // pred_region
          _
        $region40: #{tpu_custom_call.1} parent=11 // pred_fallthru
          _
        // Predicated region
        $region41: #{tpu_custom_call.1} parent=11 // pred_check
          %p436 = pneg %p247
        $region42: #{tpu_custom_call.1} parent=11 // pred_check_branch
          %438 = sbr.rel (%p436) target = $region44
        $region43: #{tpu_custom_call.1} parent=11 // pred_region
          %440 = vsyncadd [#allocation6], 0
          %s441 = sshll.u32 %s9, 4
          %s442 = int_to_ptr.hbm [resolvable:$true] %s441
          %s443 = sshll.u32 [#allocation7], 4
          %s444 = int_to_ptr.vmem [resolvable:$true] %s443
          %449 = dma.hbm_to_vmem [thread:$0]  %s442, 1024, %s444, [#allocation6], 64, 64, 4
        $region44: #{tpu_custom_call.1} parent=11 // pred_fallthru
          _
        // Predicated region
        $region45: #{tpu_custom_call.1} parent=11 // pred_check
          %p450 = pneg %p268
        $region46: #{tpu_custom_call.1} parent=11 // pred_check_branch
          %452 = sbr.rel (%p450) target = $region48
        $region47: #{tpu_custom_call.1} parent=11 // pred_region
          _
        $region48: #{tpu_custom_call.1} parent=11 // pred_fallthru
          _
        // Predicated region
        $region49: #{tpu_custom_call.1} parent=11 // pred_check
          %p453 = pneg %p289
        $region50: #{tpu_custom_call.1} parent=11 // pred_check_branch
          %455 = sbr.rel (%p453) target = $region52
        $region51: #{tpu_custom_call.1} parent=11 // pred_region
          _
        $region52: #{tpu_custom_call.1} parent=11 // pred_fallthru
          _
        // Predicated region
        $region53: #{tpu_custom_call.1} parent=11 // pred_check
          %p456 = pneg %p310
        $region54: #{tpu_custom_call.1} parent=11 // pred_check_branch
          %458 = sbr.rel (%p456) target = $region56
        $region55: #{tpu_custom_call.1} parent=11 // pred_region
          _
        $region56: #{tpu_custom_call.1} parent=11 // pred_fallthru
          _
        // Predicated region
        $region57: #{tpu_custom_call.1} parent=11 // pred_check
          %p459 = pneg %p331
        $region58: #{tpu_custom_call.1} parent=11 // pred_check_branch
          %461 = sbr.rel (%p459) target = $region60
        $region59: #{tpu_custom_call.1} parent=11 // pred_region
          %463 = vsyncadd [#allocation9], 0
          %s464 = sshll.u32 %s13, 4
          %s465 = int_to_ptr.hbm [resolvable:$true] %s464
          %s466 = sshll.u32 [#allocation8], 4
          %s467 = int_to_ptr.vmem [resolvable:$true] %s466
          %472 = dma.hbm_to_vmem [thread:$0]  %s465, 1024, %s467, [#allocation9], 64, 64, 4
        $region60: #{tpu_custom_call.1} parent=11 // pred_fallthru
          _
        // Predicated region
        $region61: #{tpu_custom_call.1} parent=11 // pred_check
          %p473 = pneg %p352
        $region62: #{tpu_custom_call.1} parent=11 // pred_check_branch
          %475 = sbr.rel (%p473) target = $region64
        $region63: #{tpu_custom_call.1} parent=11 // pred_region
          _
        $region64: #{tpu_custom_call.1} parent=11 // pred_fallthru
          _
      $region12: #{tpu_custom_call.1} parent=5 // pred_fallthru
        _
      %p476 = scmp.lt.s32.totalorder %s27, 2
      // Predicated region
      $region65: #{tpu_custom_call.1} parent=5 // pred_check
        %p477 = pneg %p476
      $region66: #{tpu_custom_call.1} parent=5 // pred_check_branch
        %479 = sbr.rel (%p477) target = $region68
      $region67: #{tpu_custom_call.1} parent=5 // pred_region
        // Predicated region
        $region69: #{tpu_custom_call.1} parent=67 // pred_check
          %p480 = pneg %p47
        $region70: #{tpu_custom_call.1} parent=67 // pred_check_branch
          %482 = sbr.rel (%p480) target = $region72
        $region71: #{tpu_custom_call.1} parent=67 // pred_region
          %s483 = smul.u32 2, %s27
          %p484 = scmp.lt.s32.totalorder %s483, 3
          %s485 = scalar_select %p484, %s483, 3
          %s486 = smul.addr %s485, 4
          %s487 = scalar_lea.vmem %s0, %s486
          %s488 = smul.u32 2, %s27
        $region72: #{tpu_custom_call.1} parent=67 // pred_fallthru
          _
        // Predicated region
        $region73: #{tpu_custom_call.1} parent=67 // pred_check
          %p489 = pneg %p73
        $region74: #{tpu_custom_call.1} parent=67 // pred_check_branch
          %491 = sbr.rel (%p489) target = $region76
        $region75: #{tpu_custom_call.1} parent=67 // pred_region
          %s492 = smul.u32 2, %s27
          %p493 = scmp.lt.s32.totalorder %s492, 3
          %s494 = scalar_select %p493, %s492, 3
          %s495 = smul.addr %s494, 4
          %s496 = scalar_lea.vmem %s1, %s495
          %s497 = smul.u32 2, %s27
        $region76: #{tpu_custom_call.1} parent=67 // pred_fallthru
          _
      $region68: #{tpu_custom_call.1} parent=5 // pred_fallthru
        _
      %p498 = scmp.le.s32.totalorder 1, %s27
      %p499 = scmp.lt.s32.totalorder %s27, 3
      %p500 = pnand %p498, %p499
      %p501 = pneg %p500
      // Predicated region
      $region77: #{tpu_custom_call.1} parent=5 // pred_check
        _
      $region78: #{tpu_custom_call.1} parent=5 // pred_check_branch
        %503 = sbr.rel (%p500) target = $region80
      $region79: #{tpu_custom_call.1} parent=5 // pred_region
        %s504 = ssub.s32 %s27, 1
        // Predicated region
        $region81: #{tpu_custom_call.1} parent=79 // pred_check
          %p505 = pneg %p163
        $region82: #{tpu_custom_call.1} parent=79 // pred_check_branch
          %507 = sbr.rel (%p505) target = $region84
        $region83: #{tpu_custom_call.1} parent=79 // pred_region
          %509 = dma.done [#allocation3], 1024
        $region84: #{tpu_custom_call.1} parent=79 // pred_fallthru
          _
        // Predicated region
        $region85: #{tpu_custom_call.1} parent=79 // pred_check
          %p510 = pneg %p205
        $region86: #{tpu_custom_call.1} parent=79 // pred_check_branch
          %512 = sbr.rel (%p510) target = $region88
        $region87: #{tpu_custom_call.1} parent=79 // pred_region
          %514 = dma.done [#allocation6], 1024
        $region88: #{tpu_custom_call.1} parent=79 // pred_fallthru
          _
        // Predicated region
        $region89: #{tpu_custom_call.1} parent=79 // pred_check
          %p515 = pneg %p247
        $region90: #{tpu_custom_call.1} parent=79 // pred_check_branch
          %517 = sbr.rel (%p515) target = $region92
        $region91: #{tpu_custom_call.1} parent=79 // pred_region
          %519 = dma.done [#allocation6], 1024
        $region92: #{tpu_custom_call.1} parent=79 // pred_fallthru
          _
        // Predicated region
        $region93: #{tpu_custom_call.1} parent=79 // pred_check
          %p520 = pneg %p331
        $region94: #{tpu_custom_call.1} parent=79 // pred_check_branch
          %522 = sbr.rel (%p520) target = $region96
        $region95: #{tpu_custom_call.1} parent=79 // pred_region
          %524 = dma.done [#allocation9], 1024
        $region96: #{tpu_custom_call.1} parent=79 // pred_fallthru
          _
        %s525 = smul.u32 2, %s32
        %p526 = scmp.lt.s32.totalorder %s525, 3
        %s527 = scalar_select %p526, %s525, 3
        %s528 = smul.addr %s527, 4
        %s529 = scalar_lea.vmem %s0, %s528
        %p530 = pneg %p53
        %p531 = pneg %p50
        %s532 = smul.u32 2, %s32
        %p533 = scmp.lt.s32.totalorder %s532, 3
        %s534 = scalar_select %p533, %s532, 3
        %s535 = smul.addr %s534, 4
        %s536 = scalar_lea.vmem %s1, %s535
        %p537 = pneg %p79
        %p538 = pneg %p76
        %p539 = pneg %p100
        %p540 = pneg %p97
        %p541 = pneg %p121
        %p542 = pneg %p118
        %p543 = pneg %p142
        %p544 = pneg %p139
        %p545 = pneg %p163
        %p546 = pneg %p160
        %p547 = pneg %p184
        %p548 = pneg %p181
        %p549 = pneg %p205
        %p550 = pneg %p202
        %p551 = pneg %p226
        %p552 = pneg %p223
        %p553 = pneg %p247
        %p554 = pneg %p244
        %p555 = pneg %p268
        %p556 = pneg %p265
        %p557 = pneg %p289
        %p558 = pneg %p286
        %p559 = pneg %p310
        %p560 = pneg %p307
        %p561 = pneg %p331
        %p562 = pneg %p328
        %p563 = pneg %p352
        %p564 = pneg %p349
        %p565 = pneg %p378
        %p566 = pneg %p375
        %s567 = sand.u32 %s365, 1
        %s568 = scalar_lea.sflag [#allocation4], %s567
        %s569 = sand.u32 %s365, 1
        %s570 = smul.addr %s569, 16
        %s571 = scalar_lea.vmem [#allocation10], %s570
        %s572 = smul.u32 2, %s32
        %p573 = scmp.lt.s32.totalorder %s572, 3
        %s574 = scalar_select %p573, %s572, 3
        %s575 = smul.addr %s574, 4
        %s576 = scalar_lea.vmem %s0, %s575
        %s577 = smul.u32 2, %s32
        %s578 = smul.u32 2, %s32
        %p579 = scmp.lt.s32.totalorder %s578, 3
        %s580 = scalar_select %p579, %s578, 3
        %s581 = smul.addr %s580, 4
        %s582 = scalar_lea.vmem %s1, %s581
        %s583 = smul.u32 2, %s32
        %v585 = vld [vmem:[%s576] sm:$0xf]
        %v586 = vld [vmem:[%s576 + $0x4] sm:$0xf]
        %v587 = vld [vmem:[%s582] sm:$0xf]
        %v588 = vld [vmem:[%s582 + $0x4] sm:$0xf]
        %v589 = vld [vmem:[%s2] sm:$0x77]
        %v592 = vunpack.c.l.b16 %v585
        %v593 = vunpack.c.l.b16 %v586
        %v594 = vpack.c.b16 %v593, %v592
        %v596 = vunpack.c.l.b16 %v589
        %v597 = vunpack.c.h.b16 %v589
        %v598 = vpack.c.b16 %v596, %v596
        %v599 = vpack.c.b16 %v597, %v597
        %vm600 = vcmask 39936
        %v602 = vsel %vm600, %v594, 0
        %vm604 = vcmask 1041408
        %vm605 = vcmask 1042432
        %v606 = vsel %vm604, 4294967295, 65535
        %v607 = vsel %vm605, %v606, 0
        %v609 = vand.u32 %v598, %v607
        %v612 = vand.u32 %v599, %v607
        %614 = vmatpush.bf16.msra.mxu0 0
        %615 = vmatpush.bf16.msra.mxu0 0
        %616 = vmatpush.bf16.msra.mxu0 0
        %617 = vmatpush.bf16.msra.mxu0 0
        %618 = vmatpush.bf16.msra.mxu0 0
        %619 = vmatpush.bf16.msra.mxu0 0
        %620 = vmatpush.bf16.msra.mxu0 0
        %621 = vmatpush.bf16.msra.mxu0 %v609
        %622 = vmatmul.bf16.gmra.mxu0 %v602
        %v623 = vpop.f32.mrf.mxu0
        %v624 = vadd.f32 0.0, %v623
        %v625 = vpop.f32.mrf.mxu0
        %v626 = vadd.f32 0.0, %v625
        %627 = vdwg.mxu0
        %628 = vmatpush.bf16.msra.mxu0 0
        %629 = vmatpush.bf16.msra.mxu0 0
        %630 = vmatpush.bf16.msra.mxu0 0
        %631 = vmatpush.bf16.msra.mxu0 0
        %632 = vmatpush.bf16.msra.mxu0 0
        %633 = vmatpush.bf16.msra.mxu0 0
        %634 = vmatpush.bf16.msra.mxu0 0
        %635 = vmatpush.bf16.msra.mxu0 %v612
        %636 = vmatmul.bf16.gmra.mxu0 %v602
        %v637 = vpop.f32.mrf.mxu0
        %v638 = vadd.f32 0.0, %v637
        %v639 = vpop.f32.mrf.mxu0
        %v640 = vadd.f32 0.0, %v639
        %641 = vdwg.mxu0
        %v642 = vld [vmem:[%s3] sm:$0x1]
        %v644 = vperm.slane %v642, 0
        %v646 = vadd.f32 %v624, %v644
        %v647 = vadd.f32 %v626, %v644
        %v648 = vmax.f32 %v646, 0.0
        %v649 = vmax.f32 %v647, 0.0
        %v650 = vpack.c.bf16 %v649, %v648
        %v651 = vld [vmem:[%s4] sm:$0x1]
        %v653 = vperm.slane %v651, 0
        %v655 = vadd.f32 %v638, %v653
        %v656 = vadd.f32 %v640, %v653
        %v657 = vmax.f32 %v655, 0.0
        %v658 = vmax.f32 %v656, 0.0
        %v659 = vpack.c.bf16 %v658, %v657
        %v660 = vld [vmem:[#allocation2] sm:$0xf]
        %v661 = vld [vmem:[#allocation2 + $0x4] sm:$0xf]
        %v662 = vld [vmem:[#allocation2 + $0x8] sm:$0xf]
        %v663 = vld [vmem:[#allocation2 + $0xc] sm:$0xf]
        %v664 = vld [vmem:[#allocation2 + $0x10] sm:$0xf]
        %v665 = vld [vmem:[#allocation2 + $0x14] sm:$0xf]
        %v666 = vld [vmem:[#allocation2 + $0x18] sm:$0xf]
        %v667 = vld [vmem:[#allocation2 + $0x1c] sm:$0xf]
        %v668 = vld [vmem:[#allocation2 + $0x20] sm:$0xf]
        %v669 = vld [vmem:[#allocation2 + $0x24] sm:$0xf]
        %v670 = vld [vmem:[#allocation2 + $0x28] sm:$0xf]
        %v671 = vld [vmem:[#allocation2 + $0x2c] sm:$0xf]
        %v672 = vld [vmem:[#allocation2 + $0x30] sm:$0xf]
        %v673 = vld [vmem:[#allocation2 + $0x34] sm:$0xf]
        %v674 = vld [vmem:[#allocation2 + $0x38] sm:$0xf]
        %v675 = vld [vmem:[#allocation2 + $0x3c] sm:$0xf]
        %v676 = vld [vmem:[%s6] sm:$0x1]
        %v678 = vperm.slane %v676, 0
        %v696 = vunpack.c.l.b16 %v660
        %v697 = vunpack.c.l.b16 %v661
        %v698 = vunpack.c.l.b16 %v662
        %v699 = vunpack.c.l.b16 %v663
        %v700 = vunpack.c.l.b16 %v664
        %v701 = vunpack.c.l.b16 %v665
        %v702 = vunpack.c.l.b16 %v666
        %v703 = vunpack.c.l.b16 %v667
        %v704 = vunpack.c.l.b16 %v668
        %v705 = vunpack.c.l.b16 %v669
        %v706 = vunpack.c.l.b16 %v670
        %v707 = vunpack.c.l.b16 %v671
        %v708 = vunpack.c.l.b16 %v672
        %v709 = vunpack.c.l.b16 %v673
        %v710 = vunpack.c.l.b16 %v674
        %v711 = vunpack.c.l.b16 %v675
        %v712 = vpack.c.b16 %v697, %v696
        %v713 = vpack.c.b16 %v699, %v698
        %v714 = vpack.c.b16 %v701, %v700
        %v715 = vpack.c.b16 %v703, %v702
        %v716 = vpack.c.b16 %v705, %v704
        %v717 = vpack.c.b16 %v707, %v706
        %v718 = vpack.c.b16 %v709, %v708
        %v719 = vpack.c.b16 %v711, %v710
        %728 = vmatpush.bf16.msra.mxu0 %v719
        %729 = vmatpush.bf16.msra.mxu0 %v718
        %730 = vmatpush.bf16.msra.mxu0 %v717
        %731 = vmatpush.bf16.msra.mxu0 %v716
        %732 = vmatpush.bf16.msra.mxu0 %v715
        %733 = vmatpush.bf16.msra.mxu0 %v714
        %734 = vmatpush.bf16.msra.mxu0 %v713
        %735 = vmatpush.bf16.msra.mxu0 %v712
        %736 = vmatmul.bf16.gmra.mxu0 %v650
        %v737 = vpop.f32.mrf.mxu0
        %v738 = vadd.f32 %v678, %v737
        %v739 = vpop.f32.mrf.mxu0
        %v740 = vadd.f32 %v678, %v739
        %741 = vdwg.mxu0
        %v742 = vmax.f32 %v738, 0.0
        %v743 = vmax.f32 %v740, 0.0
        %v744 = vpack.c.bf16 %v743, %v742
        %v745 = vld [vmem:[#allocation5] sm:$0xf]
        %v746 = vld [vmem:[#allocation5 + $0x4] sm:$0xf]
        %v747 = vld [vmem:[#allocation5 + $0x8] sm:$0xf]
        %v748 = vld [vmem:[#allocation5 + $0xc] sm:$0xf]
        %v749 = vld [vmem:[#allocation5 + $0x10] sm:$0xf]
        %v750 = vld [vmem:[#allocation5 + $0x14] sm:$0xf]
        %v751 = vld [vmem:[#allocation5 + $0x18] sm:$0xf]
        %v752 = vld [vmem:[#allocation5 + $0x1c] sm:$0xf]
        %v753 = vld [vmem:[#allocation5 + $0x20] sm:$0xf]
        %v754 = vld [vmem:[#allocation5 + $0x24] sm:$0xf]
        %v755 = vld [vmem:[#allocation5 + $0x28] sm:$0xf]
        %v756 = vld [vmem:[#allocation5 + $0x2c] sm:$0xf]
        %v757 = vld [vmem:[#allocation5 + $0x30] sm:$0xf]
        %v758 = vld [vmem:[#allocation5 + $0x34] sm:$0xf]
        %v759 = vld [vmem:[#allocation5 + $0x38] sm:$0xf]
        %v760 = vld [vmem:[#allocation5 + $0x3c] sm:$0xf]
        %v761 = vld [vmem:[%s8] sm:$0x1]
        %v763 = vperm.slane %v761, 0
        %v781 = vunpack.c.l.b16 %v745
        %v782 = vunpack.c.l.b16 %v746
        %v783 = vunpack.c.l.b16 %v747
        %v784 = vunpack.c.l.b16 %v748
        %v785 = vunpack.c.l.b16 %v749
        %v786 = vunpack.c.l.b16 %v750
        %v787 = vunpack.c.l.b16 %v751
        %v788 = vunpack.c.l.b16 %v752
        %v789 = vunpack.c.l.b16 %v753
        %v790 = vunpack.c.l.b16 %v754
        %v791 = vunpack.c.l.b16 %v755
        %v792 = vunpack.c.l.b16 %v756
        %v793 = vunpack.c.l.b16 %v757
        %v794 = vunpack.c.l.b16 %v758
        %v795 = vunpack.c.l.b16 %v759
        %v796 = vunpack.c.l.b16 %v760
        %v797 = vpack.c.b16 %v782, %v781
        %v798 = vpack.c.b16 %v784, %v783
        %v799 = vpack.c.b16 %v786, %v785
        %v800 = vpack.c.b16 %v788, %v787
        %v801 = vpack.c.b16 %v790, %v789
        %v802 = vpack.c.b16 %v792, %v791
        %v803 = vpack.c.b16 %v794, %v793
        %v804 = vpack.c.b16 %v796, %v795
        %813 = vmatpush.bf16.msra.mxu0 %v804
        %814 = vmatpush.bf16.msra.mxu0 %v803
        %815 = vmatpush.bf16.msra.mxu0 %v802
        %816 = vmatpush.bf16.msra.mxu0 %v801
        %817 = vmatpush.bf16.msra.mxu0 %v800
        %818 = vmatpush.bf16.msra.mxu0 %v799
        %819 = vmatpush.bf16.msra.mxu0 %v798
        %820 = vmatpush.bf16.msra.mxu0 %v797
        %821 = vmatmul.bf16.gmra.mxu0 %v744
        %v822 = vpop.f32.mrf.mxu0
        %v823 = vadd.f32 %v763, %v822
        %v824 = vpop.f32.mrf.mxu0
        %v825 = vadd.f32 %v763, %v824
        %826 = vdwg.mxu0
        %v827 = vpack.c.bf16 %v823, %v823
        %v828 = vpack.c.bf16 %v825, %v825
        %v829 = vld [vmem:[#allocation7] sm:$0xf]
        %v830 = vld [vmem:[#allocation7 + $0x4] sm:$0xf]
        %v831 = vld [vmem:[#allocation7 + $0x8] sm:$0xf]
        %v832 = vld [vmem:[#allocation7 + $0xc] sm:$0xf]
        %v833 = vld [vmem:[#allocation7 + $0x10] sm:$0xf]
        %v834 = vld [vmem:[#allocation7 + $0x14] sm:$0xf]
        %v835 = vld [vmem:[#allocation7 + $0x18] sm:$0xf]
        %v836 = vld [vmem:[#allocation7 + $0x1c] sm:$0xf]
        %v837 = vld [vmem:[#allocation7 + $0x20] sm:$0xf]
        %v838 = vld [vmem:[#allocation7 + $0x24] sm:$0xf]
        %v839 = vld [vmem:[#allocation7 + $0x28] sm:$0xf]
        %v840 = vld [vmem:[#allocation7 + $0x2c] sm:$0xf]
        %v841 = vld [vmem:[#allocation7 + $0x30] sm:$0xf]
        %v842 = vld [vmem:[#allocation7 + $0x34] sm:$0xf]
        %v843 = vld [vmem:[#allocation7 + $0x38] sm:$0xf]
        %v844 = vld [vmem:[#allocation7 + $0x3c] sm:$0xf]
        %v845 = vld [vmem:[%s10] sm:$0x1]
        %v847 = vperm.slane %v845, 0
        %v865 = vunpack.c.l.b16 %v829
        %v866 = vunpack.c.l.b16 %v830
        %v867 = vunpack.c.l.b16 %v831
        %v868 = vunpack.c.l.b16 %v832
        %v869 = vunpack.c.l.b16 %v833
        %v870 = vunpack.c.l.b16 %v834
        %v871 = vunpack.c.l.b16 %v835
        %v872 = vunpack.c.l.b16 %v836
        %v873 = vunpack.c.l.b16 %v837
        %v874 = vunpack.c.l.b16 %v838
        %v875 = vunpack.c.l.b16 %v839
        %v876 = vunpack.c.l.b16 %v840
        %v877 = vunpack.c.l.b16 %v841
        %v878 = vunpack.c.l.b16 %v842
        %v879 = vunpack.c.l.b16 %v843
        %v880 = vunpack.c.l.b16 %v844
        %v881 = vpack.c.b16 %v866, %v865
        %v882 = vpack.c.b16 %v868, %v867
        %v883 = vpack.c.b16 %v870, %v869
        %v884 = vpack.c.b16 %v872, %v871
        %v885 = vpack.c.b16 %v874, %v873
        %v886 = vpack.c.b16 %v876, %v875
        %v887 = vpack.c.b16 %v878, %v877
        %v888 = vpack.c.b16 %v880, %v879
        %897 = vmatpush.bf16.msra.mxu0 %v888
        %898 = vmatpush.bf16.msra.mxu0 %v887
        %899 = vmatpush.bf16.msra.mxu0 %v886
        %900 = vmatpush.bf16.msra.mxu0 %v885
        %901 = vmatpush.bf16.msra.mxu0 %v884
        %902 = vmatpush.bf16.msra.mxu0 %v883
        %903 = vmatpush.bf16.msra.mxu0 %v882
        %904 = vmatpush.bf16.msra.mxu0 %v881
        %905 = vmatmul.bf16.gmra.mxu0 %v659
        %v906 = vpop.f32.mrf.mxu0
        %v907 = vadd.f32 %v847, %v906
        %v908 = vpop.f32.mrf.mxu0
        %v909 = vadd.f32 %v847, %v908
        %910 = vdwg.mxu0
        %v911 = vpack.c.bf16 %v907, %v907
        %v912 = vpack.c.bf16 %v909, %v909
        %v913 = vld [vmem:[%s11] sm:$0x3]
        %v914 = vld [vmem:[%s12] sm:$0x1]
        %v916 = vperm.slane %v914, 0
        %v920 = vunpack.c.l.b16 %v587
        %v921 = vunpack.c.l.b16 %v588
        %v922 = vpack.c.b16 %v921, %v920
        %vm923 = vcmask 23552
        %v925 = vsel %vm923, %v922, 0
        %vm927 = vcmask 1040384
        %v928 = vsel %vm927, 4294967295, 65535
        %v929 = vsel %vm604, %v928, 0
        %v931 = vand.u32 %v913, %v929
        %933 = vmatpush.bf16.msra.mxu0 0
        %934 = vmatpush.bf16.msra.mxu0 0
        %935 = vmatpush.bf16.msra.mxu0 0
        %936 = vmatpush.bf16.msra.mxu0 0
        %937 = vmatpush.bf16.msra.mxu0 0
        %938 = vmatpush.bf16.msra.mxu0 0
        %939 = vmatpush.bf16.msra.mxu0 0
        %940 = vmatpush.bf16.msra.mxu0 %v931
        %941 = vmatmul.bf16.gmra.mxu0 %v925
        %v942 = vpop.f32.mrf.mxu0
        %v943 = vadd.f32 %v916, %v942
        %v944 = vpop.f32.mrf.mxu0
        %v945 = vadd.f32 %v916, %v944
        %946 = vdwg.mxu0
        %v947 = vmax.f32 %v943, 0.0
        %v948 = vmax.f32 %v945, 0.0
        %v949 = vpack.c.bf16 %v948, %v947
        %v950 = vld [vmem:[#allocation8] sm:$0xf]
        %v951 = vld [vmem:[#allocation8 + $0x4] sm:$0xf]
        %v952 = vld [vmem:[#allocation8 + $0x8] sm:$0xf]
        %v953 = vld [vmem:[#allocation8 + $0xc] sm:$0xf]
        %v954 = vld [vmem:[#allocation8 + $0x10] sm:$0xf]
        %v955 = vld [vmem:[#allocation8 + $0x14] sm:$0xf]
        %v956 = vld [vmem:[#allocation8 + $0x18] sm:$0xf]
        %v957 = vld [vmem:[#allocation8 + $0x1c] sm:$0xf]
        %v958 = vld [vmem:[#allocation8 + $0x20] sm:$0xf]
        %v959 = vld [vmem:[#allocation8 + $0x24] sm:$0xf]
        %v960 = vld [vmem:[#allocation8 + $0x28] sm:$0xf]
        %v961 = vld [vmem:[#allocation8 + $0x2c] sm:$0xf]
        %v962 = vld [vmem:[#allocation8 + $0x30] sm:$0xf]
        %v963 = vld [vmem:[#allocation8 + $0x34] sm:$0xf]
        %v964 = vld [vmem:[#allocation8 + $0x38] sm:$0xf]
        %v965 = vld [vmem:[#allocation8 + $0x3c] sm:$0xf]
        %v966 = vld [vmem:[%s14] sm:$0x1]
        %v968 = vperm.slane %v966, 0
        %v986 = vunpack.c.l.b16 %v950
        %v987 = vunpack.c.l.b16 %v951
        %v988 = vunpack.c.l.b16 %v952
        %v989 = vunpack.c.l.b16 %v953
        %v990 = vunpack.c.l.b16 %v954
        %v991 = vunpack.c.l.b16 %v955
        %v992 = vunpack.c.l.b16 %v956
        %v993 = vunpack.c.l.b16 %v957
        %v994 = vunpack.c.l.b16 %v958
        %v995 = vunpack.c.l.b16 %v959
        %v996 = vunpack.c.l.b16 %v960
        %v997 = vunpack.c.l.b16 %v961
        %v998 = vunpack.c.l.b16 %v962
        %v999 = vunpack.c.l.b16 %v963
        %v1000 = vunpack.c.l.b16 %v964
        %v1001 = vunpack.c.l.b16 %v965
        %v1002 = vpack.c.b16 %v987, %v986
        %v1003 = vpack.c.b16 %v989, %v988
        %v1004 = vpack.c.b16 %v991, %v990
        %v1005 = vpack.c.b16 %v993, %v992
        %v1006 = vpack.c.b16 %v995, %v994
        %v1007 = vpack.c.b16 %v997, %v996
        %v1008 = vpack.c.b16 %v999, %v998
        %v1009 = vpack.c.b16 %v1001, %v1000
        %1018 = vmatpush.bf16.msra.mxu0 %v1009
        %1019 = vmatpush.bf16.msra.mxu0 %v1008
        %1020 = vmatpush.bf16.msra.mxu0 %v1007
        %1021 = vmatpush.bf16.msra.mxu0 %v1006
        %1022 = vmatpush.bf16.msra.mxu0 %v1005
        %1023 = vmatpush.bf16.msra.mxu0 %v1004
        %1024 = vmatpush.bf16.msra.mxu0 %v1003
        %1025 = vmatpush.bf16.msra.mxu0 %v1002
        %1026 = vmatmul.bf16.gmra.mxu0 %v949
        %v1027 = vpop.f32.mrf.mxu0
        %v1028 = vadd.f32 %v968, %v1027
        %v1029 = vpop.f32.mrf.mxu0
        %v1030 = vadd.f32 %v968, %v1029
        %1031 = vdwg.mxu0
        %v1032 = vpack.c.bf16 %v1028, %v1028
        %v1033 = vpack.c.bf16 %v1030, %v1030
        %v1036 = vunpack.c.l.b16 %v1032
        %v1037 = vunpack.c.l.b16 %v1033
        %v1038 = vpack.c.b16 %v1037, %v1036
        %v1042 = vunpack.c.l.b16 %v911
        %v1043 = vunpack.c.l.b16 %v912
        %v1044 = vpack.c.b16 %v1043, %v1042
        %1046 = vmatpush.bf16.xpose.msra.mxu0 0
        %1047 = vmatpush.bf16.xpose.msra.mxu0 0
        %1048 = vmatpush.bf16.xpose.msra.mxu0 0
        %1049 = vmatpush.bf16.xpose.msra.mxu0 0
        %1050 = vmatpush.bf16.xpose.msra.mxu0 0
        %1051 = vmatpush.bf16.xpose.msra.mxu0 0
        %1052 = vmatpush.bf16.xpose.msra.mxu0 0
        %1053 = vmatpush.bf16.xpose.msra.mxu0 %v1044
        %1054 = vmatmul.bf16.gmra.mxu0 %v1038
        %v1055 = vpop.f32.mrf.mxu0
        %v1056 = vadd.f32 0.0, %v1055
        %v1057 = vpop.f32.mrf.mxu0
        %v1058 = vadd.f32 0.0, %v1057
        %1059 = vdwg.mxu0
        %vm1060 = vcmask 130048
        %v1061 = vsel %vm1060, %v1056, -inf
        %1062 = vmax.xlane.f32.xlu0 %v1061
        %v1063 = vpop.xlane.xlu0 %1062
        %v1064 = vsel %vm1060, %v1058, -inf
        %1065 = vmax.xlane.f32.xlu0 %v1064
        %v1066 = vpop.xlane.xlu0 %1065
        %v1067 = vsub.f32 %v1056, %v1063
        %v1068 = vsub.f32 %v1058, %v1066
        %v1069 = vmul.f32 %v1067, 1.442695
        %v1070 = vpow.pop %v1069
        %v1071 = vmul.f32 %v1068, 1.442695
        %v1072 = vpow.pop %v1071
        %v1073 = vsel %vm1060, %v1070, 0.0
        %1074 = vadd.xlane.f32.xlu0 %v1073
        %v1075 = vpop.xlane.xlu0 %1074
        %v1076 = vsel %vm1060, %v1072, 0.0
        %1077 = vadd.xlane.f32.xlu0 %v1076
        %v1078 = vpop.xlane.xlu0 %1077
        %v1079 = vrcp.pop %v1075
        %v1080 = vrcp.pop %v1078
        %v1081 = vmul.f32 %v1070, %v1079
        %v1082 = vmul.f32 %v1072, %v1080
        %v1083 = vpack.c.bf16 %v1081, %v1081
        %v1084 = vpack.c.bf16 %v1082, %v1082
        %v1087 = vunpack.c.l.b16 %v1083
        %v1088 = vunpack.c.l.b16 %v1084
        %v1089 = vpack.c.b16 %v1088, %v1087
        %v1092 = vunpack.c.l.b16 %v827
        %v1093 = vunpack.c.l.b16 %v828
        %v1094 = vpack.c.b16 %v1093, %v1092
        %v1097 = vsel %vm1060, %v1089, 0
        %1099 = vmatpush.bf16.msra.mxu0 0
        %1100 = vmatpush.bf16.msra.mxu0 0
        %1101 = vmatpush.bf16.msra.mxu0 0
        %1102 = vmatpush.bf16.msra.mxu0 0
        %1103 = vmatpush.bf16.msra.mxu0 0
        %1104 = vmatpush.bf16.msra.mxu0 0
        %1105 = vmatpush.bf16.msra.mxu0 0
        %1106 = vmatpush.bf16.msra.mxu0 %v1094
        %1107 = vmatmul.bf16.gmra.mxu0 %v1097
        %v1108 = vpop.f32.mrf.mxu0
        %v1109 = vadd.f32 0.0, %v1108
        %v1110 = vpop.f32.mrf.mxu0
        %v1111 = vadd.f32 0.0, %v1110
        %1112 = vdwg.mxu0
        %1113 = vst [vmem:[%s571] sm:$0xff] %v1109
        %1114 = vst [vmem:[%s571 + $0x8] sm:$0xff] %v1111
        %s1115 = sand.u32 %s365, 1
        %s1116 = scalar_lea.sflag [#allocation4], %s1115
        %s1117 = sand.u32 %s365, 1
        %s1118 = smul.addr %s1117, 16
        %s1119 = scalar_lea.vmem [#allocation10], %s1118
        // Predicated region
        $region97: #{tpu_custom_call.1} parent=79 // pred_check
          %p1120 = pneg %p375
        $region98: #{tpu_custom_call.1} parent=79 // pred_check_branch
          %1122 = sbr.rel (%p1120) target = $region100
        $region99: #{tpu_custom_call.1} parent=79 // pred_region
          %1124 = vsyncadd %s1116, 0
          %s1125 = smul.addr %s32, 2
          %s1126 = smul.addr %s1125, 8
          %s1127 = scalar_lea.hbm %s15, %s1126
          %s1128 = sshll.u32 %s1119, 4
          %s1129 = int_to_ptr.vmem [resolvable:$true] %s1128
          %s1130 = sshll.u32 %s1127, 4
          %s1131 = int_to_ptr.hbm [resolvable:$true] %s1130
          %1136 = dma.vmem_to_hbm [thread:$0]  %s1129, 256, %s1131, %s1116, 128, 128, 8
        $region100: #{tpu_custom_call.1} parent=79 // pred_fallthru
          _
      $region80: #{tpu_custom_call.1} parent=5 // pred_fallthru
        _
      %p1137 = scmp.le.s32.totalorder 2, %s27
      // Predicated region
      $region101: #{tpu_custom_call.1} parent=5 // pred_check
        %p1138 = pneg %p1137
      $region102: #{tpu_custom_call.1} parent=5 // pred_check_branch
        %1140 = sbr.rel (%p1138) target = $region104
      $region103: #{tpu_custom_call.1} parent=5 // pred_region
        %s1141 = ssub.s32 %s27, 2
        // Predicated region
        $region105: #{tpu_custom_call.1} parent=103 // pred_check
          %p1142 = pneg %p381
        $region106: #{tpu_custom_call.1} parent=103 // pred_check_branch
          %1144 = sbr.rel (%p1142) target = $region108
        $region107: #{tpu_custom_call.1} parent=103 // pred_region
          %s1145 = sand.u32 %s366, 1
          %s1146 = scalar_lea.sflag [#allocation4], %s1145
          %s1147 = sand.u32 %s366, 1
          %s1148 = smul.addr %s1147, 16
          %s1149 = scalar_lea.vmem [#allocation10], %s1148
          %1151 = dma.done %s1146, 256
        $region108: #{tpu_custom_call.1} parent=103 // pred_fallthru
          _
      $region104: #{tpu_custom_call.1} parent=5 // pred_fallthru
        _
    $region6: #{tpu_custom_call.1} parent=1 // loop_footer
      %s31 = sadd.s32 1, %s27
    $region7: #{tpu_custom_call.1} parent=1 // loop_footer_branch
      %26 = sbr.rel target = $region3
    $region8: #{tpu_custom_call.1} parent=1 // loop_exit
      _
    %1152 = vsyncpa [#allocation3], 1
    %s1153 = scalar_lea.sflag [#allocation3], 1
    %1154 = vsyncpa %s1153, 1
    %1155 = vsyncpa [#allocation6], 1
    %1156 = vsyncpa [#allocation9], 1
    %1157 = vsyncpa [#allocation4], 1
    %s1158 = scalar_lea.sflag [#allocation4], 1
    %1159 = vsyncpa %s1158, 1

</llo_original>
